<compile_context>
chip_gen: v6e
topology: v6e:2x2x1
jax: 0.10.0
libtpu: 0.0.40
codegen_flags: <defaults>
</compile_context>

<pallas_src>
import math
import functools

import jax
import jax.numpy as jnp
from jax import lax
from jax.experimental import pallas as pl
from jax.experimental.pallas import tpu as pltpu

EPS = 1e-5
EPS_SQRT = math.sqrt(EPS)


def _gnn_kernel(x_ref, w_ref, b_ref, o_ref):
    """x_ref/o_ref: (TB, TG, D); w_ref/b_ref: (TG, D) (broadcast over TB)."""
    x = x_ref[...].astype(jnp.float32)

    # --- standardize: mean / biased var over the group axis (two-pass) ---
    mean = jnp.mean(x, axis=-1, keepdims=True)
    xc = x - mean
    var = jnp.mean(xc * xc, axis=-1, keepdims=True)        # correction=0
    inv = lax.rsqrt(var + EPS)                              # EUP rsqrt per row
    xs = xc * inv

    pos = xs >= 0.0                                         # sign(0) -> +1 (matches torch fixup)
    x_sign = jnp.where(pos, 1.0, -1.0)
    x_abs = jnp.abs(xs)

    one_p_abs = 1.0 + x_abs
    # NOTE: kept as log(1+x)/exp(.)-1 (guaranteed Mosaic lowering); log1p/expm1
    # would only improve accuracy for tiny |xs|, already covered by tolerance.
    xlog = jnp.log(one_p_abs)                               # log1p(|x|)
    x_masked = x_sign * xlog                                # also the log-limit branch

    # --- fused stats sweep: all Newton-step moments in one pass over the block ---
    d = one_p_abs * xlog - x_abs
    p1 = one_p_abs * (xlog * xlog) - 2.0 * d
    s1 = jnp.mean(x_masked, axis=-1, keepdims=True)
    m_xd = jnp.mean(xs * d, axis=-1, keepdims=True)
    dmean = jnp.mean(d, axis=-1, keepdims=True)
    m_d2 = jnp.mean(d * d, axis=-1, keepdims=True)
    m_xp1 = jnp.mean(x_abs * p1, axis=-1, keepdims=True)

    # --- per-row (TB, TG, 1) Newton step for lambda ---
    dvar = 2.0 * m_xd
    g1 = 0.5 * dvar - s1
    # mean((d - dmean)^2) = mean(d^2) - dmean^2  (removes the d_sub pass)
    d2var = 2.0 * (m_xp1 + m_d2 - dmean * dmean)
    g2 = 0.5 * d2var - 0.5 * (dvar * dvar)
    lmbda = 1.0 - g1 / (g2 + EPS_SQRT)

    # --- per-row transform constants: eta only takes 2 values per row ---
    eta_p = lmbda                                           # where x_sign == +1
    eta_n = 2.0 - lmbda                                     # where x_sign == -1
    e_p = eta_p + jnp.where(eta_p >= 0.0, EPS_SQRT, -EPS_SQRT)
    e_n = eta_n + jnp.where(eta_n >= 0.0, EPS_SQRT, -EPS_SQRT)
    r_p = 1.0 / e_p                                         # exact div on row scalars
    r_n = 1.0 / e_n
    log_p_f = jnp.where(jnp.abs(eta_p) <= EPS_SQRT, 1.0, 0.0)
    log_n_f = jnp.where(jnp.abs(eta_n) <= EPS_SQRT, 1.0, 0.0)

    # --- transform + affine sweep (per-element: 3 selects + exp) ---
    e = jnp.where(pos, e_p, e_n)
    sr = jnp.where(pos, r_p, -r_n)                          # x_sign / e
    use_log = jnp.where(pos, log_p_f, log_n_f)
    tr1 = sr * (jnp.exp(e * xlog) - 1.0)                    # ((1+|x|)^e - 1) * sign/e
    x_tr = jnp.where(use_log > 0.5, x_masked, tr1)

    # TODO(synk): training-mode scaled_additive_normal_noise (torch.randn_like)
    # is omitted; this kernel implements the eval-mode forward pass only.

    w = w_ref[...].astype(jnp.float32)                      # (TG, D), VMEM-resident
    b = b_ref[...].astype(jnp.float32)
    o_ref[...] = (x_tr * w + b).astype(o_ref.dtype)


def _divisors(n):
    return [t for t in range(1, n + 1) if n % t == 0]


def _vmem_capacity_bytes():
    try:
        return int(pltpu.get_tpu_info().vmem_capacity_bytes)
    except Exception:
        return 64 * 1024 * 1024  # conservative default (v7x-sized)


@functools.partial(jax.jit, static_argnames=("num_groups",))
def group_normal_norm(x, weight, bias, num_groups=32):
    """Eval-mode forward of GroupNormalNorm via a Pallas TPU kernel.

    x: (B, C, *spatial);  weight, bias: (C,)
    """
    B, C = x.shape[0], x.shape[1]
    G = num_groups
    assert C % G == 0, "num_channels must be divisible by num_groups"
    S = math.prod(x.shape[2:]) if x.ndim > 2 else 1         # static ints under jit
    Cg = C // G
    D = Cg * S                                              # reduced group axis

    x3 = x.reshape(B, G, D)
    # Per-channel params in (group, position-in-group) layout; small one-time op.
    w2 = jnp.repeat(weight.reshape(G, Cg), S, axis=1)       # (G, D)
    b2 = jnp.repeat(bias.reshape(G, Cg), S, axis=1)

    # --- generation-aware block budget & VMEM limit ---
    cap = _vmem_capacity_bytes()
    if cap >= 100 * (1 << 20):        # v5e / v6e: 128 MiB VMEM, 1 TensorCore
        budget, vmem_limit, two_core = 2 << 20, 64 << 20, False
    elif cap >= 48 * (1 << 20):       # v7x: 64 MiB VMEM, 2 TensorCores
        budget, vmem_limit, two_core = 1 << 20, 48 << 20, True
    else:                             # older / unknown small-VMEM parts
        budget, vmem_limit, two_core = 512 * 1024, min(cap * 3 // 4, 32 << 20), False

    # --- row tiling: TG group-rows (sublane-packed multiple, or == G) ---
    itemsize = int(jnp.dtype(x.dtype).itemsize)
    sub = max(8, 32 // max(itemsize, 1))                    # 8 f32, 16 bf16, 32 int8
    row_bytes = D * 4                                       # f32 working set per row
    tg_cands = sorted({t for t in _divisors(G) if t % sub == 0} | {G}, reverse=True)
    TG = next((t for t in tg_cands if t * row_bytes <= budget), tg_cands[-1])
    # TODO(synk): no D-tiled fallback — extremely large spatial extents (one group
    # row + temporaries exceeding the VMEM budget) would need a two-stage
    # moments/transform pipeline with the reduction axis in the grid.
    TB = next((t for t in sorted(_divisors(B), reverse=True)
               if t * TG * row_bytes <= budget), 1)

    # v7x: keep both TensorCores busy (>= 2 parallel grid steps) when legal.
    if two_core and (B // TB) * (G // TG) < 2:
        smaller_tb = [t for t in _divisors(B) if t < TB]
        if smaller_tb:
            TB = max(smaller_tb)
        elif len(tg_cands) > 1:
            TG = tg_cands[1]

    # Batch is the fastest-varying grid axis -> w/b block index is unchanged
    # across consecutive steps and Pallas skips the re-DMA (resident in VMEM).
    grid = (G // TG, B // TB)

    out3 = pl.pallas_call(
        _gnn_kernel,
        out_shape=jax.ShapeDtypeStruct((B, G, D), x.dtype),
        grid_spec=pl.GridSpec(
            grid=grid,
            in_specs=[
                pl.BlockSpec((TB, TG, D), lambda gi, bi: (bi, gi, 0)),
                pl.BlockSpec((TG, D), lambda gi, bi: (gi, 0)),
                pl.BlockSpec((TG, D), lambda gi, bi: (gi, 0)),
            ],
            out_specs=pl.BlockSpec((TB, TG, D), lambda gi, bi: (bi, gi, 0)),
        ),
        compiler_params=pltpu.CompilerParams(
            dimension_semantics=("parallel", "parallel"),
            vmem_limit_bytes=vmem_limit,
        ),
    )(x3, w2, b2)

    return out3.reshape(x.shape)


def _reference(x, weight, bias, num_groups):
    """Pure-JAX reference mirroring the PyTorch eval-mode forward."""
    B, C = x.shape[0], x.shape[1]
    G = num_groups
    S = math.prod(x.shape[2:]) if x.ndim > 2 else 1
    D = (C // G) * S
    xf = x.reshape(B, G, D).astype(jnp.float32)
    mean = jnp.mean(xf, -1, keepdims=True)
    var = jnp.mean(jnp.square(xf - mean), -1, keepdims=True)
    xs = (xf - mean) / jnp.sqrt(var + EPS)
    sgn = jnp.where(xs >= 0.0, 1.0, -1.0)
    ab = jnp.abs(xs)
    xl = jnp.log1p(ab)
    s1 = jnp.mean(sgn * xl, -1, keepdims=True)
    d = (1.0 + ab) * xl - ab
    dvar = 2.0 * jnp.mean(xs * d, -1, keepdims=True)
    g1 = 0.5 * dvar - s1
    dmean = jnp.mean(d, -1, keepdims=True)
    p1 = (1.0 + ab) * jnp.square(xl) - 2.0 * d
    t2 = xs * (sgn * p1) + jnp.square(d - dmean)
    d2var = 2.0 * jnp.mean(t2, -1, keepdims=True)
    g2 = -0.5 * jnp.square(dvar) + 0.5 * d2var
    lm = 1.0 - g1 / (g2 + EPS_SQRT)
    eta = 1.0 + sgn * (lm - 1.0)
    es = jnp.where(eta >= 0.0, 1.0, -1.0)
    e = eta + es * EPS_SQRT
    tr1 = (sgn / e) * (jnp.power(1.0 + ab, e) - 1.0)
    tr2 = sgn * xl
    xt = jnp.where(jnp.abs(eta) <= EPS_SQRT, tr2, tr1)
    w2 = jnp.repeat(weight.reshape(G, C // G), S, axis=1)
    b2 = jnp.repeat(bias.reshape(G, C // G), S, axis=1)
    out = xt * w2 + b2
    return out.reshape(x.shape).astype(x.dtype)


if __name__ == "__main__":
    # Module config: num_channels=32, num_groups=8, input (B, C, H, W).
    # D = (C/G) * H*W = 4 * 256 = 1024 -> lane-dense (multiple of 128).
    batch, channels, num_groups, h, w = 2, 32, 8, 16, 16
    key = jax.random.PRNGKey(0)
    kx, kw, kb = jax.random.split(key, 3)
    x = jax.random.normal(kx, (batch, channels, h, w), dtype=jnp.float32)
    weight = 1.0 + 0.1 * jax.random.normal(kw, (channels,), dtype=jnp.float32)
    bias = 0.1 * jax.random.normal(kb, (channels,), dtype=jnp.float32)

    out = group_normal_norm(x, weight, bias, num_groups=num_groups)
    out = jax.block_until_ready(out)

    ref = _reference(x, weight, bias, num_groups)
    assert out.shape == x.shape and out.dtype == x.dtype
    # Tolerance covers the rsqrt / log(1+x)/exp(.)-1 rewrites (reciprocal is now exact).
    assert jnp.allclose(out, ref, atol=5e-3, rtol=5e-3), "mismatch vs. JAX reference"

    print("KERNEL_OK")
</pallas_src>

<mosaic_0001>
module attributes {stable_mosaic.version = 11 : i64} {
  func.func @_gnn_kernel(%arg0: i32, %arg1: i32, %arg2: memref<1x8x1024xf32, #tpu.memory_space<vmem>>, %arg3: memref<8x1024xf32, #tpu.memory_space<vmem>>, %arg4: memref<8x1024xf32, #tpu.memory_space<vmem>>, %arg5: memref<1x8x1024xf32, #tpu.memory_space<vmem>>) attributes {dimension_semantics = [#tpu.dimension_semantics<parallel>, #tpu.dimension_semantics<parallel>], iteration_bounds = array<i64: 1, 2>, scalar_prefetch = 0 : i64, scratch_operands = 0 : i64, tpu.core_type = #tpu.core_type<tc>, window_params = [{transform_indices = @transform_0, window_bounds = array<i64: 1, 8, 1024>}, {transform_indices = @transform_1, window_bounds = array<i64: 8, 1024>}, {transform_indices = @transform_2, window_bounds = array<i64: 8, 1024>}, {transform_indices = @transform_3, window_bounds = array<i64: 1, 8, 1024>}]} {
    %c0 = arith.constant 0 : index
    %c0_0 = arith.constant 0 : index
    %c0_1 = arith.constant 0 : index
    %0 = vector.load %arg2[%c0, %c0_0, %c0_1] : memref<1x8x1024xf32, #tpu.memory_space<vmem>>, vector<1x8x1024xf32>
    %cst = arith.constant dense<0.000000e+00> : vector<1x8xf32>
    %1 = vector.multi_reduction <add>, %0, %cst [2] : vector<1x8x1024xf32> to vector<1x8xf32>
    %2 = vector.shape_cast %1 : vector<1x8xf32> to vector<1x8x1xf32>
    %cst_2 = arith.constant 1.024000e+03 : f32
    %3 = vector.broadcast %cst_2 : f32 to vector<1x8x1xf32>
    %4 = arith.divf %2, %3 : vector<1x8x1xf32>
    %5 = vector.broadcast %4 : vector<1x8x1xf32> to vector<1x8x1024xf32>
    %6 = arith.subf %0, %5 : vector<1x8x1024xf32>
    %7 = arith.mulf %6, %6 : vector<1x8x1024xf32>
    %cst_3 = arith.constant dense<0.000000e+00> : vector<1x8xf32>
    %8 = vector.multi_reduction <add>, %7, %cst_3 [2] : vector<1x8x1024xf32> to vector<1x8xf32>
    %9 = vector.shape_cast %8 : vector<1x8xf32> to vector<1x8x1xf32>
    %cst_4 = arith.constant 1.024000e+03 : f32
    %10 = vector.broadcast %cst_4 : f32 to vector<1x8x1xf32>
    %11 = arith.divf %9, %10 : vector<1x8x1xf32>
    %cst_5 = arith.constant 9.99999974E-6 : f32
    %12 = vector.broadcast %cst_5 : f32 to vector<1x8x1xf32>
    %13 = arith.addf %11, %12 : vector<1x8x1xf32>
    %14 = math.rsqrt %13 : vector<1x8x1xf32>
    %15 = vector.broadcast %14 : vector<1x8x1xf32> to vector<1x8x1024xf32>
    %16 = arith.mulf %6, %15 : vector<1x8x1024xf32>
    %cst_6 = arith.constant 0.000000e+00 : f32
    %17 = vector.broadcast %cst_6 : f32 to vector<1x8x1024xf32>
    %18 = arith.cmpf oge, %16, %17 : vector<1x8x1024xf32>
    %cst_7 = arith.constant 1.000000e+00 : f32
    %cst_8 = arith.constant -1.000000e+00 : f32
    %19 = vector.broadcast %cst_7 : f32 to vector<1x8x1024xf32>
    %20 = vector.broadcast %cst_8 : f32 to vector<1x8x1024xf32>
    %21 = arith.select %18, %19, %20 : vector<1x8x1024xi1>, vector<1x8x1024xf32>
    %22 = math.absf %16 : vector<1x8x1024xf32>
    %cst_9 = arith.constant 1.000000e+00 : f32
    %23 = vector.broadcast %cst_9 : f32 to vector<1x8x1024xf32>
    %24 = arith.addf %23, %22 : vector<1x8x1024xf32>
    %25 = math.log %24 : vector<1x8x1024xf32>
    %26 = arith.mulf %21, %25 : vector<1x8x1024xf32>
    %27 = arith.mulf %24, %25 : vector<1x8x1024xf32>
    %28 = arith.subf %27, %22 : vector<1x8x1024xf32>
    %29 = arith.mulf %25, %25 : vector<1x8x1024xf32>
    %30 = arith.mulf %24, %29 : vector<1x8x1024xf32>
    %cst_10 = arith.constant 2.000000e+00 : f32
    %31 = vector.broadcast %cst_10 : f32 to vector<1x8x1024xf32>
    %32 = arith.mulf %31, %28 : vector<1x8x1024xf32>
    %33 = arith.subf %30, %32 : vector<1x8x1024xf32>
    %cst_11 = arith.constant dense<0.000000e+00> : vector<1x8xf32>
    %34 = vector.multi_reduction <add>, %26, %cst_11 [2] : vector<1x8x1024xf32> to vector<1x8xf32>
    %35 = vector.shape_cast %34 : vector<1x8xf32> to vector<1x8x1xf32>
    %cst_12 = arith.constant 1.024000e+03 : f32
    %36 = vector.broadcast %cst_12 : f32 to vector<1x8x1xf32>
    %37 = arith.divf %35, %36 : vector<1x8x1xf32>
    %38 = arith.mulf %16, %28 : vector<1x8x1024xf32>
    %cst_13 = arith.constant dense<0.000000e+00> : vector<1x8xf32>
    %39 = vector.multi_reduction <add>, %38, %cst_13 [2] : vector<1x8x1024xf32> to vector<1x8xf32>
    %40 = vector.shape_cast %39 : vector<1x8xf32> to vector<1x8x1xf32>
    %cst_14 = arith.constant 1.024000e+03 : f32
    %41 = vector.broadcast %cst_14 : f32 to vector<1x8x1xf32>
    %42 = arith.divf %40, %41 : vector<1x8x1xf32>
    %cst_15 = arith.constant dense<0.000000e+00> : vector<1x8xf32>
    %43 = vector.multi_reduction <add>, %28, %cst_15 [2] : vector<1x8x1024xf32> to vector<1x8xf32>
    %44 = vector.shape_cast %43 : vector<1x8xf32> to vector<1x8x1xf32>
    %cst_16 = arith.constant 1.024000e+03 : f32
    %45 = vector.broadcast %cst_16 : f32 to vector<1x8x1xf32>
    %46 = arith.divf %44, %45 : vector<1x8x1xf32>
    %47 = arith.mulf %28, %28 : vector<1x8x1024xf32>
    %cst_17 = arith.constant dense<0.000000e+00> : vector<1x8xf32>
    %48 = vector.multi_reduction <add>, %47, %cst_17 [2] : vector<1x8x1024xf32> to vector<1x8xf32>
    %49 = vector.shape_cast %48 : vector<1x8xf32> to vector<1x8x1xf32>
    %cst_18 = arith.constant 1.024000e+03 : f32
    %50 = vector.broadcast %cst_18 : f32 to vector<1x8x1xf32>
    %51 = arith.divf %49, %50 : vector<1x8x1xf32>
    %52 = arith.mulf %22, %33 : vector<1x8x1024xf32>
    %cst_19 = arith.constant dense<0.000000e+00> : vector<1x8xf32>
    %53 = vector.multi_reduction <add>, %52, %cst_19 [2] : vector<1x8x1024xf32> to vector<1x8xf32>
    %54 = vector.shape_cast %53 : vector<1x8xf32> to vector<1x8x1xf32>
    %cst_20 = arith.constant 1.024000e+03 : f32
    %55 = vector.broadcast %cst_20 : f32 to vector<1x8x1xf32>
    %56 = arith.divf %54, %55 : vector<1x8x1xf32>
    %cst_21 = arith.constant 2.000000e+00 : f32
    %57 = vector.broadcast %cst_21 : f32 to vector<1x8x1xf32>
    %58 = arith.mulf %57, %42 : vector<1x8x1xf32>
    %cst_22 = arith.constant 5.000000e-01 : f32
    %59 = vector.broadcast %cst_22 : f32 to vector<1x8x1xf32>
    %60 = arith.mulf %59, %58 : vector<1x8x1xf32>
    %61 = arith.subf %60, %37 : vector<1x8x1xf32>
    %62 = arith.addf %56, %51 : vector<1x8x1xf32>
    %63 = arith.mulf %46, %46 : vector<1x8x1xf32>
    %64 = arith.subf %62, %63 : vector<1x8x1xf32>
    %cst_23 = arith.constant 2.000000e+00 : f32
    %65 = vector.broadcast %cst_23 : f32 to vector<1x8x1xf32>
    %66 = arith.mulf %65, %64 : vector<1x8x1xf32>
    %cst_24 = arith.constant 5.000000e-01 : f32
    %67 = vector.broadcast %cst_24 : f32 to vector<1x8x1xf32>
    %68 = arith.mulf %67, %66 : vector<1x8x1xf32>
    %69 = arith.mulf %58, %58 : vector<1x8x1xf32>
    %cst_25 = arith.constant 5.000000e-01 : f32
    %70 = vector.broadcast %cst_25 : f32 to vector<1x8x1xf32>
    %71 = arith.mulf %70, %69 : vector<1x8x1xf32>
    %72 = arith.subf %68, %71 : vector<1x8x1xf32>
    %cst_26 = arith.constant 0.00316227763 : f32
    %73 = vector.broadcast %cst_26 : f32 to vector<1x8x1xf32>
    %74 = arith.addf %72, %73 : vector<1x8x1xf32>
    %75 = arith.divf %61, %74 : vector<1x8x1xf32>
    %cst_27 = arith.constant 1.000000e+00 : f32
    %76 = vector.broadcast %cst_27 : f32 to vector<1x8x1xf32>
    %77 = arith.subf %76, %75 : vector<1x8x1xf32>
    %cst_28 = arith.constant 2.000000e+00 : f32
    %78 = vector.broadcast %cst_28 : f32 to vector<1x8x1xf32>
    %79 = arith.subf %78, %77 : vector<1x8x1xf32>
    %cst_29 = arith.constant 0.000000e+00 : f32
    %80 = vector.broadcast %cst_29 : f32 to vector<1x8x1xf32>
    %81 = arith.cmpf oge, %77, %80 : vector<1x8x1xf32>
    %cst_30 = arith.constant 0.00316227763 : f32
    %cst_31 = arith.constant -0.00316227763 : f32
    %82 = vector.broadcast %cst_30 : f32 to vector<1x8x1xf32>
    %83 = vector.broadcast %cst_31 : f32 to vector<1x8x1xf32>
    %84 = arith.select %81, %82, %83 : vector<1x8x1xi1>, vector<1x8x1xf32>
    %85 = arith.addf %77, %84 : vector<1x8x1xf32>
    %cst_32 = arith.constant 0.000000e+00 : f32
    %86 = vector.broadcast %cst_32 : f32 to vector<1x8x1xf32>
    %87 = arith.cmpf oge, %79, %86 : vector<1x8x1xf32>
    %cst_33 = arith.constant 0.00316227763 : f32
    %cst_34 = arith.constant -0.00316227763 : f32
    %88 = vector.broadcast %cst_33 : f32 to vector<1x8x1xf32>
    %89 = vector.broadcast %cst_34 : f32 to vector<1x8x1xf32>
    %90 = arith.select %87, %88, %89 : vector<1x8x1xi1>, vector<1x8x1xf32>
    %91 = arith.addf %79, %90 : vector<1x8x1xf32>
    %cst_35 = arith.constant 1.000000e+00 : f32
    %92 = vector.broadcast %cst_35 : f32 to vector<1x8x1xf32>
    %93 = arith.divf %92, %85 : vector<1x8x1xf32>
    %cst_36 = arith.constant 1.000000e+00 : f32
    %94 = vector.broadcast %cst_36 : f32 to vector<1x8x1xf32>
    %95 = arith.divf %94, %91 : vector<1x8x1xf32>
    %96 = math.absf %77 : vector<1x8x1xf32>
    %cst_37 = arith.constant 0.00316227763 : f32
    %97 = vector.broadcast %cst_37 : f32 to vector<1x8x1xf32>
    %98 = arith.cmpf ole, %96, %97 : vector<1x8x1xf32>
    %cst_38 = arith.constant 1.000000e+00 : f32
    %cst_39 = arith.constant 0.000000e+00 : f32
    %99 = vector.broadcast %cst_38 : f32 to vector<1x8x1xf32>
    %100 = vector.broadcast %cst_39 : f32 to vector<1x8x1xf32>
    %101 = arith.select %98, %99, %100 : vector<1x8x1xi1>, vector<1x8x1xf32>
    %102 = math.absf %79 : vector<1x8x1xf32>
    %cst_40 = arith.constant 0.00316227763 : f32
    %103 = vector.broadcast %cst_40 : f32 to vector<1x8x1xf32>
    %104 = arith.cmpf ole, %102, %103 : vector<1x8x1xf32>
    %cst_41 = arith.constant 1.000000e+00 : f32
    %cst_42 = arith.constant 0.000000e+00 : f32
    %105 = vector.broadcast %cst_41 : f32 to vector<1x8x1xf32>
    %106 = vector.broadcast %cst_42 : f32 to vector<1x8x1xf32>
    %107 = arith.select %104, %105, %106 : vector<1x8x1xi1>, vector<1x8x1xf32>
    %108 = vector.shape_cast %85 : vector<1x8x1xf32> to vector<1x8x1xf32>
    %109 = vector.broadcast %108 : vector<1x8x1xf32> to vector<1x8x1024xf32>
    %110 = vector.shape_cast %91 : vector<1x8x1xf32> to vector<1x8x1xf32>
    %111 = vector.broadcast %110 : vector<1x8x1xf32> to vector<1x8x1024xf32>
    %112 = arith.select %18, %109, %111 : vector<1x8x1024xi1>, vector<1x8x1024xf32>
    %cst_43 = arith.constant 0.000000e+00 : f32
    %113 = vector.broadcast %cst_43 : f32 to vector<1x8x1xf32>
    %114 = arith.subf %113, %95 : vector<1x8x1xf32>
    %115 = vector.shape_cast %93 : vector<1x8x1xf32> to vector<1x8x1xf32>
    %116 = vector.broadcast %115 : vector<1x8x1xf32> to vector<1x8x1024xf32>
    %117 = vector.shape_cast %114 : vector<1x8x1xf32> to vector<1x8x1xf32>
    %118 = vector.broadcast %117 : vector<1x8x1xf32> to vector<1x8x1024xf32>
    %119 = arith.select %18, %116, %118 : vector<1x8x1024xi1>, vector<1x8x1024xf32>
    %120 = vector.shape_cast %101 : vector<1x8x1xf32> to vector<1x8x1xf32>
    %121 = vector.broadcast %120 : vector<1x8x1xf32> to vector<1x8x1024xf32>
    %122 = vector.shape_cast %107 : vector<1x8x1xf32> to vector<1x8x1xf32>
    %123 = vector.broadcast %122 : vector<1x8x1xf32> to vector<1x8x1024xf32>
    %124 = arith.select %18, %121, %123 : vector<1x8x1024xi1>, vector<1x8x1024xf32>
    %125 = arith.mulf %112, %25 : vector<1x8x1024xf32>
    %126 = math.exp %125 : vector<1x8x1024xf32>
    %cst_44 = arith.constant 1.000000e+00 : f32
    %127 = vector.broadcast %cst_44 : f32 to vector<1x8x1024xf32>
    %128 = arith.subf %126, %127 : vector<1x8x1024xf32>
    %129 = arith.mulf %119, %128 : vector<1x8x1024xf32>
    %cst_45 = arith.constant 5.000000e-01 : f32
    %130 = vector.broadcast %cst_45 : f32 to vector<1x8x1024xf32>
    %131 = arith.cmpf ogt, %124, %130 : vector<1x8x1024xf32>
    %132 = arith.select %131, %26, %129 : vector<1x8x1024xi1>, vector<1x8x1024xf32>
    %c0_46 = arith.constant 0 : index
    %c0_47 = arith.constant 0 : index
    %133 = vector.load %arg3[%c0_46, %c0_47] : memref<8x1024xf32, #tpu.memory_space<vmem>>, vector<8x1024xf32>
    %c0_48 = arith.constant 0 : index
    %c0_49 = arith.constant 0 : index
    %134 = vector.load %arg4[%c0_48, %c0_49] : memref<8x1024xf32, #tpu.memory_space<vmem>>, vector<8x1024xf32>
    %135 = vector.shape_cast %133 : vector<8x1024xf32> to vector<1x8x1024xf32>
    %136 = arith.mulf %132, %135 : vector<1x8x1024xf32>
    %137 = vector.shape_cast %134 : vector<8x1024xf32> to vector<1x8x1024xf32>
    %138 = arith.addf %136, %137 : vector<1x8x1024xf32>
    %c0_50 = arith.constant 0 : index
    %c0_51 = arith.constant 0 : index
    %c0_52 = arith.constant 0 : index
    %139 = vector.load %arg5[%c0_50, %c0_51, %c0_52] : memref<1x8x1024xf32, #tpu.memory_space<vmem>>, vector<1x8x1024xf32>
    tpu.vector_store %arg5[%c0_50, %c0_51, %c0_52], %138 {strides = array<i32>} : memref<1x8x1024xf32, #tpu.memory_space<vmem>>, vector<1x8x1024xf32>,
    return
  }
  func.func @transform_0(%arg0: i32, %arg1: i32) -> (i32, i32, i32) {
    %c0_i32 = arith.constant 0 : i32
    %c0_i32_0 = arith.constant 0 : i32
    return %arg1, %arg0, %c0_i32 : i32, i32, i32
  }
  func.func @transform_1(%arg0: i32, %arg1: i32) -> (i32, i32) {
    %c0_i32 = arith.constant 0 : i32
    %c0_i32_0 = arith.constant 0 : i32
    return %arg0, %c0_i32 : i32, i32
  }
  func.func @transform_2(%arg0: i32, %arg1: i32) -> (i32, i32) {
    %c0_i32 = arith.constant 0 : i32
    %c0_i32_0 = arith.constant 0 : i32
    return %arg0, %c0_i32 : i32, i32
  }
  func.func @transform_3(%arg0: i32, %arg1: i32) -> (i32, i32, i32) {
    %c0_i32 = arith.constant 0 : i32
    %c0_i32_0 = arith.constant 0 : i32
    return %arg1, %arg0, %c0_i32 : i32, i32, i32
  }
}

</mosaic_0001>

<llo_original>
// kernel: group_normal_norm.1
$region0: #{group_normal_norm.1}
  #allocation0 [shape = 'u32[]', space=smem, size = 0x4, offset = 0x4, fixed_abs, tag = 'smem constant byte address 0x4 - core index']
  #allocation1 [shape = 'u32[144,128]{1,0:T(1,128)}', space=vmem, size = 0x12000, scoped, tag = 'internal scratch']
  %s0 = inlined_call_operand.vmem [shape: f32[2,8,1024], index: 0, kind: input, shape index: {}]
  %s1 = inlined_call_operand.vmem [shape: f32[8,1024], index: 1, kind: input, shape index: {}]
  %s2 = inlined_call_operand.vmem [shape: f32[8,1024], index: 2, kind: input, shape index: {}]
  %s3 = inlined_call_operand.vmem [shape: f32[2,8,1024], index: 3, kind: output, shape index: {}]
  %s4 = sld [smem:[#allocation0]]
  $region45: #{group_normal_norm.1} parent=0
    _
  %s6 = ssub.s32 1, %s4
  %s7 = scalar_select 0, %s6, %s4
  loop: start=0, step=1, limit=4
  $region2: #{group_normal_norm.1} parent=0 // loop_pre_header
    _
  $region3: #{group_normal_norm.1} parent=0 // loop_header
    %s9 = sphi 0, %s13
    %p10 = scmp.ge.s32.totalorder %s9, 4
    %s16 = sphi 0, %s28
    %s17 = sphi 0, %s24
    %s18 = sphi 0, %s16
    %s19 = sphi 0, %s17
    %s20 = sphi 0, %s18
    %s21 = sphi 0, %s19
    %s33 = sphi 0, %s35
    %s36 = sphi 0, %s33
    %s37 = sphi 0, %s36
    %s53 = sphi 0, %s37
    %s59 = sphi 0, %s61
    %s62 = sphi 0, %s59
    %s63 = sphi 0, %s62
    %s79 = sphi 0, %s63
    %s85 = sphi 0, %s87
    %s88 = sphi 0, %s85
    %s89 = sphi 0, %s88
    %s105 = sphi 0, %s89
    %s113 = sphi 0, %s115
    %s116 = sphi 0, %s113
    %s117 = sphi 0, %s116
    %s133 = sphi 0, %s117
  $region4: #{group_normal_norm.1} parent=0 // loop_header_branch
    %12 = sbr.rel (%p10) target = $region8
  $region5: #{group_normal_norm.1} parent=0 // loop_body
    %s14 = ssub.s32 %s9, 1
    %s15 = ssub.s32 %s9, 2
    %s22 = sadd.s32 1, %s17
    %p23 = scmp.ge.s32.totalorder %s22, 2
    %s24 = scalar_select %p23, 0, %s22
    %s25 = sadd.s32 1, %s16
    %s26 = scalar_select %p23, %s25, %s16
    %p27 = scmp.ge.s32.totalorder %s26, 1
    %s28 = scalar_select %p27, 0, %s26
    %s29 = ssub.s32 %s17, %s24
    %s30 = ssub.s32 %s16, %s28
    %s31 = sor.u32 %s29, %s30
    %p32 = scmp.eq.s32.totalorder %s31, 0
    %s34 = sadd.s32 %s33, 1
    %s35 = scalar_select %p32, %s33, %s34
    %p38 = pneg %p32
    %p39 = scmp.eq.s32.totalorder %s9, 1
    %p40 = por %p38, %p39
    %p41 = scmp.ne.s32.totalorder %s33, %s36
    %p42 = scmp.eq.s32.totalorder %s9, 0
    %p43 = por %p41, %p42
    %p44 = scmp.ne.s32.totalorder %s33, %s36
    %p45 = scmp.eq.s32.totalorder %s14, 1
    %p46 = por %p44, %p45
    %p47 = scmp.ne.s32.totalorder %s36, %s37
    %p48 = scmp.eq.s32.totalorder %s14, 0
    %p49 = por %p47, %p48
    %p50 = scmp.ne.s32.totalorder %s36, %s37
    %p51 = scmp.eq.s32.totalorder %s15, 1
    %p52 = por %p50, %p51
    %p54 = scmp.ne.s32.totalorder %s37, %s53
    %p55 = scmp.eq.s32.totalorder %s15, 0
    %p56 = por %p54, %p55
    %s57 = ssub.s32 %s16, %s28
    %p58 = scmp.eq.s32.totalorder %s57, 0
    %s60 = sadd.s32 %s59, 1
    %s61 = scalar_select %p58, %s59, %s60
    %p64 = pneg %p58
    %p65 = scmp.eq.s32.totalorder %s9, 1
    %p66 = por %p64, %p65
    %p67 = scmp.ne.s32.totalorder %s59, %s62
    %p68 = scmp.eq.s32.totalorder %s9, 0
    %p69 = por %p67, %p68
    %p70 = scmp.ne.s32.totalorder %s59, %s62
    %p71 = scmp.eq.s32.totalorder %s14, 1
    %p72 = por %p70, %p71
    %p73 = scmp.ne.s32.totalorder %s62, %s63
    %p74 = scmp.eq.s32.totalorder %s14, 0
    %p75 = por %p73, %p74
    %p76 = scmp.ne.s32.totalorder %s62, %s63
    %p77 = scmp.eq.s32.totalorder %s15, 1
    %p78 = por %p76, %p77
    %p80 = scmp.ne.s32.totalorder %s63, %s79
    %p81 = scmp.eq.s32.totalorder %s15, 0
    %p82 = por %p80, %p81
    %s83 = ssub.s32 %s16, %s28
    %p84 = scmp.eq.s32.totalorder %s83, 0
    %s86 = sadd.s32 %s85, 1
    %s87 = scalar_select %p84, %s85, %s86
    %p90 = pneg %p84
    %p91 = scmp.eq.s32.totalorder %s9, 1
    %p92 = por %p90, %p91
    %p93 = scmp.ne.s32.totalorder %s85, %s88
    %p94 = scmp.eq.s32.totalorder %s9, 0
    %p95 = por %p93, %p94
    %p96 = scmp.ne.s32.totalorder %s85, %s88
    %p97 = scmp.eq.s32.totalorder %s14, 1
    %p98 = por %p96, %p97
    %p99 = scmp.ne.s32.totalorder %s88, %s89
    %p100 = scmp.eq.s32.totalorder %s14, 0
    %p101 = por %p99, %p100
    %p102 = scmp.ne.s32.totalorder %s88, %s89
    %p103 = scmp.eq.s32.totalorder %s15, 1
    %p104 = por %p102, %p103
    %p106 = scmp.ne.s32.totalorder %s89, %s105
    %p107 = scmp.eq.s32.totalorder %s15, 0
    %p108 = por %p106, %p107
    %s109 = ssub.s32 %s17, %s24
    %s110 = ssub.s32 %s16, %s28
    %s111 = sor.u32 %s109, %s110
    %p112 = scmp.eq.s32.totalorder %s111, 0
    %s114 = sadd.s32 %s113, 1
    %s115 = scalar_select %p112, %s113, %s114
    %p118 = pneg %p112
    %p119 = scmp.eq.s32.totalorder %s9, 1
    %p120 = por %p118, %p119
    %p121 = scmp.ne.s32.totalorder %s113, %s116
    %p122 = scmp.eq.s32.totalorder %s9, 0
    %p123 = por %p121, %p122
    %p124 = scmp.ne.s32.totalorder %s113, %s116
    %p125 = scmp.eq.s32.totalorder %s14, 1
    %p126 = por %p124, %p125
    %p127 = scmp.ne.s32.totalorder %s116, %s117
    %p128 = scmp.eq.s32.totalorder %s14, 0
    %p129 = por %p127, %p128
    %p130 = scmp.ne.s32.totalorder %s116, %s117
    %p131 = scmp.eq.s32.totalorder %s15, 1
    %p132 = por %p130, %p131
    %p134 = scmp.ne.s32.totalorder %s117, %s133
    %p135 = scmp.eq.s32.totalorder %s15, 0
    %p136 = por %p134, %p135
    %p137 = scmp.le.s32.totalorder 1, %s9
    %p138 = scmp.lt.s32.totalorder %s9, 3
    %p139 = pnand %p137, %p138
    %p140 = pneg %p139
    // Predicated region
    $region9: #{group_normal_norm.1} parent=5 // pred_check
      _
    $region10: #{group_normal_norm.1} parent=5 // pred_check_branch
      %142 = sbr.rel (%p139) target = $region12
    $region11: #{group_normal_norm.1} parent=5 // pred_region
      %s143 = ssub.s32 %s9, 1
      // Predicated region
      $region13: #{group_normal_norm.1} parent=11 // pred_check
        %p144 = pneg %p75
      $region14: #{group_normal_norm.1} parent=11 // pred_check_branch
        %146 = sbr.rel (%p144) target = $region16
      $region15: #{group_normal_norm.1} parent=11 // pred_region
        %p147 = scmp.lt.s32.totalorder %s18, 0
        %s148 = scalar_select %p147, %s18, 0
        %s149 = smul.addr %s148, 8
        %s150 = smul.addr %s149, 8
        %s151 = scalar_lea.vmem %s1, %s150
      $region16: #{group_normal_norm.1} parent=11 // pred_fallthru
        _
      // Predicated region
      $region17: #{group_normal_norm.1} parent=11 // pred_check
        %p152 = pneg %p101
      $region18: #{group_normal_norm.1} parent=11 // pred_check_branch
        %154 = sbr.rel (%p152) target = $region20
      $region19: #{group_normal_norm.1} parent=11 // pred_region
        %p155 = scmp.lt.s32.totalorder %s18, 0
        %s156 = scalar_select %p155, %s18, 0
        %s157 = smul.addr %s156, 8
        %s158 = smul.addr %s157, 8
        %s159 = scalar_lea.vmem %s2, %s158
      $region20: #{group_normal_norm.1} parent=11 // pred_fallthru
        _
    $region12: #{group_normal_norm.1} parent=5 // pred_fallthru
      _
    %p160 = scmp.lt.s32.totalorder %s9, 2
    // Predicated region
    $region21: #{group_normal_norm.1} parent=5 // pred_check
      %p161 = pneg %p160
    $region22: #{group_normal_norm.1} parent=5 // pred_check_branch
      %163 = sbr.rel (%p161) target = $region24
    $region23: #{group_normal_norm.1} parent=5 // pred_region
      // Predicated region
      $region25: #{group_normal_norm.1} parent=23 // pred_check
        %p164 = pneg %p43
      $region26: #{group_normal_norm.1} parent=23 // pred_check_branch
        %166 = sbr.rel (%p164) target = $region28
      $region27: #{group_normal_norm.1} parent=23 // pred_region
        %p167 = scmp.lt.s32.totalorder %s17, 1
        %s168 = scalar_select %p167, %s17, 1
        %p169 = scmp.lt.s32.totalorder %s16, 0
        %s170 = scalar_select %p169, %s16, 0
        %s171 = smul.addr %s170, 8
        %s172 = smul.addr %s168, 8
        %s173 = sadd.s32 %s171, %s172
        %s174 = smul.addr %s173, 8
        %s175 = scalar_lea.vmem %s0, %s174
      $region28: #{group_normal_norm.1} parent=23 // pred_fallthru
        _
    $region24: #{group_normal_norm.1} parent=5 // pred_fallthru
      _
    %p176 = scmp.le.s32.totalorder 1, %s9
    %p177 = scmp.lt.s32.totalorder %s9, 3
    %p178 = pnand %p176, %p177
    %p179 = pneg %p178
    // Predicated region
    $region29: #{group_normal_norm.1} parent=5 // pred_check
      _
    $region30: #{group_normal_norm.1} parent=5 // pred_check_branch
      %181 = sbr.rel (%p178) target = $region32
    $region31: #{group_normal_norm.1} parent=5 // pred_region
      %s182 = ssub.s32 %s9, 1
      %p183 = scmp.lt.s32.totalorder %s19, 1
      %s184 = scalar_select %p183, %s19, 1
      %p185 = scmp.lt.s32.totalorder %s18, 0
      %s186 = scalar_select %p185, %s18, 0
      %s187 = smul.addr %s186, 8
      %s188 = smul.addr %s184, 8
      %s189 = sadd.s32 %s187, %s188
      %s190 = smul.addr %s189, 8
      %s191 = scalar_lea.vmem %s0, %s190
      %p192 = pneg %p49
      %p193 = pneg %p46
      %p194 = scmp.lt.s32.totalorder %s18, 0
      %s195 = scalar_select %p194, %s18, 0
      %s196 = smul.addr %s195, 8
      %s197 = smul.addr %s196, 8
      %s198 = scalar_lea.vmem %s1, %s197
      %p199 = pneg %p75
      %p200 = pneg %p72
      %p201 = scmp.lt.s32.totalorder %s18, 0
      %s202 = scalar_select %p201, %s18, 0
      %s203 = smul.addr %s202, 8
      %s204 = smul.addr %s203, 8
      %s205 = scalar_lea.vmem %s2, %s204
      %p206 = pneg %p101
      %p207 = pneg %p98
      %p208 = pneg %p129
      %p209 = pneg %p126
      %p210 = scmp.lt.s32.totalorder %s19, 1
      %s211 = scalar_select %p210, %s19, 1
      %p212 = scmp.lt.s32.totalorder %s18, 0
      %s213 = scalar_select %p212, %s18, 0
      %s214 = smul.addr %s213, 8
      %s215 = smul.addr %s211, 8
      %s216 = sadd.s32 %s214, %s215
      %s217 = smul.addr %s216, 8
      %s218 = scalar_lea.vmem %s3, %s217
      %p219 = scmp.lt.s32.totalorder %s19, 1
      %s220 = scalar_select %p219, %s19, 1
      %p221 = scmp.lt.s32.totalorder %s18, 0
      %s222 = scalar_select %p221, %s18, 0
      %s223 = smul.addr %s222, 8
      %s224 = smul.addr %s220, 8
      %s225 = sadd.s32 %s223, %s224
      %s226 = smul.addr %s225, 8
      %s227 = scalar_lea.vmem %s0, %s226
      %p228 = scmp.lt.s32.totalorder %s18, 0
      %s229 = scalar_select %p228, %s18, 0
      %s230 = smul.addr %s229, 8
      %s231 = smul.addr %s230, 8
      %s232 = scalar_lea.vmem %s1, %s231
      %p233 = scmp.lt.s32.totalorder %s18, 0
      %s234 = scalar_select %p233, %s18, 0
      %s235 = smul.addr %s234, 8
      %s236 = smul.addr %s235, 8
      %s237 = scalar_lea.vmem %s2, %s236
      %p238 = scmp.lt.s32.totalorder %s19, 1
      %s239 = scalar_select %p238, %s19, 1
      %p240 = scmp.lt.s32.totalorder %s18, 0
      %s241 = scalar_select %p240, %s18, 0
      %s242 = smul.addr %s241, 8
      %s243 = smul.addr %s239, 8
      %s244 = sadd.s32 %s242, %s243
      %s245 = smul.addr %s244, 8
      %s246 = scalar_lea.vmem %s3, %s245
      %v247 = vld [vmem:[%s227] sm:$0xff]
      %v248 = vld [vmem:[%s227 + $0x8] sm:$0xff]
      %v249 = vld [vmem:[%s227 + $0x10] sm:$0xff]
      %v250 = vld [vmem:[%s227 + $0x18] sm:$0xff]
      %v251 = vld [vmem:[%s227 + $0x20] sm:$0xff]
      %v252 = vld [vmem:[%s227 + $0x28] sm:$0xff]
      %v253 = vld [vmem:[%s227 + $0x30] sm:$0xff]
      %v254 = vld [vmem:[%s227 + $0x38] sm:$0xff]
      %v255 = vadd.f32 %v247, %v248
      %v256 = vadd.f32 %v255, %v249
      %v257 = vadd.f32 %v256, %v250
      %v258 = vadd.f32 %v257, %v251
      %v259 = vadd.f32 %v258, %v252
      %v260 = vadd.f32 %v259, %v253
      %v261 = vadd.f32 %v260, %v254
      %262 = vadd.xlane.f32.xlu0 %v261
      %v263 = vpop.xlane.xlu0 %262
      %v264 = vrcp.pop 1024.0
      %v265 = vmul.f32 %v263, %v264
      %v266 = vsub.f32 %v247, %v265
      %v267 = vsub.f32 %v248, %v265
      %v268 = vsub.f32 %v249, %v265
      %v269 = vsub.f32 %v250, %v265
      %v270 = vsub.f32 %v251, %v265
      %v271 = vsub.f32 %v252, %v265
      %v272 = vsub.f32 %v253, %v265
      %v273 = vsub.f32 %v254, %v265
      %v274 = vmul.f32 %v266, %v266
      %v275 = vmul.f32 %v267, %v267
      %v276 = vmul.f32 %v268, %v268
      %v277 = vmul.f32 %v269, %v269
      %v278 = vmul.f32 %v270, %v270
      %v279 = vmul.f32 %v271, %v271
      %v280 = vmul.f32 %v272, %v272
      %v281 = vmul.f32 %v273, %v273
      %v282 = vadd.f32 %v274, %v275
      %v283 = vadd.f32 %v282, %v276
      %v284 = vadd.f32 %v283, %v277
      %v285 = vadd.f32 %v284, %v278
      %v286 = vadd.f32 %v285, %v279
      %v287 = vadd.f32 %v286, %v280
      %v288 = vadd.f32 %v287, %v281
      %289 = vadd.xlane.f32.xlu0 %v288
      %v290 = vpop.xlane.xlu0 %289
      %v291 = vmul.f32 %v290, %v264
      %v292 = vadd.f32 %v291, 1e-05
      %v293 = vrsqrt.pop %v292
      %v294 = vmul.f32 %v266, %v293
      %v295 = vmul.f32 %v267, %v293
      %v296 = vmul.f32 %v268, %v293
      %v297 = vmul.f32 %v269, %v293
      %v298 = vmul.f32 %v270, %v293
      %v299 = vmul.f32 %v271, %v293
      %v300 = vmul.f32 %v272, %v293
      %v301 = vmul.f32 %v273, %v293
      %vm302 = vcmp.ge.f32.partialorder %v294, 0.0
      %vm303 = vcmp.ge.f32.partialorder %v295, 0.0
      %vm304 = vcmp.ge.f32.partialorder %v296, 0.0
      %vm305 = vcmp.ge.f32.partialorder %v297, 0.0
      %vm306 = vcmp.ge.f32.partialorder %v298, 0.0
      %vm307 = vcmp.ge.f32.partialorder %v299, 0.0
      %vm308 = vcmp.ge.f32.partialorder %v300, 0.0
      %vm309 = vcmp.ge.f32.partialorder %v301, 0.0
      %v310 = vsel %vm302, 1.0, -1.0
      %v311 = vsel %vm303, 1.0, -1.0
      %v312 = vsel %vm304, 1.0, -1.0
      %v313 = vsel %vm305, 1.0, -1.0
      %v314 = vsel %vm306, 1.0, -1.0
      %v315 = vsel %vm307, 1.0, -1.0
      %v316 = vsel %vm308, 1.0, -1.0
      %v317 = vsel %vm309, 1.0, -1.0
      %v318 = vand.u32 2147483647, %v294
      %v319 = vand.u32 2147483647, %v295
      %v320 = vand.u32 2147483647, %v296
      %v321 = vand.u32 2147483647, %v297
      %v322 = vand.u32 2147483647, %v298
      %v323 = vand.u32 2147483647, %v299
      %v324 = vand.u32 2147483647, %v300
      %v325 = vand.u32 2147483647, %v301
      %v326 = vadd.f32 %v318, 1.0
      %v327 = vadd.f32 %v319, 1.0
      %v328 = vadd.f32 %v320, 1.0
      %v329 = vadd.f32 %v321, 1.0
      %v330 = vadd.f32 %v322, 1.0
      %v331 = vadd.f32 %v323, 1.0
      %v332 = vadd.f32 %v324, 1.0
      %v333 = vadd.f32 %v325, 1.0
      %v334 = vlog2.pop %v326
      %v335 = vmul.f32 %v334, 0.6931472
      %v336 = vlog2.pop %v327
      %v337 = vmul.f32 %v336, 0.6931472
      %v338 = vlog2.pop %v328
      %v339 = vmul.f32 %v338, 0.6931472
      %v340 = vlog2.pop %v329
      %v341 = vmul.f32 %v340, 0.6931472
      %v342 = vlog2.pop %v330
      %v343 = vmul.f32 %v342, 0.6931472
      %v344 = vlog2.pop %v331
      %v345 = vmul.f32 %v344, 0.6931472
      %v346 = vlog2.pop %v332
      %v347 = vmul.f32 %v346, 0.6931472
      %v348 = vlog2.pop %v333
      %v349 = vmul.f32 %v348, 0.6931472
      %v350 = vmul.f32 %v310, %v335
      %v351 = vmul.f32 %v311, %v337
      %v352 = vmul.f32 %v312, %v339
      %v353 = vmul.f32 %v313, %v341
      %v354 = vmul.f32 %v314, %v343
      %v355 = vmul.f32 %v315, %v345
      %v356 = vmul.f32 %v316, %v347
      %v357 = vmul.f32 %v317, %v349
      %v358 = vmul.f32 %v326, %v335
      %v359 = vmul.f32 %v327, %v337
      %v360 = vmul.f32 %v328, %v339
      %v361 = vmul.f32 %v329, %v341
      %v362 = vmul.f32 %v330, %v343
      %v363 = vmul.f32 %v331, %v345
      %v364 = vmul.f32 %v332, %v347
      %v365 = vmul.f32 %v333, %v349
      %v366 = vsub.f32 %v358, %v318
      %v367 = vsub.f32 %v359, %v319
      %v368 = vsub.f32 %v360, %v320
      %v369 = vsub.f32 %v361, %v321
      %v370 = vsub.f32 %v362, %v322
      %v371 = vsub.f32 %v363, %v323
      %v372 = vsub.f32 %v364, %v324
      %v373 = vsub.f32 %v365, %v325
      %v374 = vmul.f32 %v335, %v335
      %v375 = vmul.f32 %v337, %v337
      %v376 = vmul.f32 %v339, %v339
      %v377 = vmul.f32 %v341, %v341
      %v378 = vmul.f32 %v343, %v343
      %v379 = vmul.f32 %v345, %v345
      %v380 = vmul.f32 %v347, %v347
      %v381 = vmul.f32 %v349, %v349
      %v382 = vmul.f32 %v326, %v374
      %v383 = vmul.f32 %v327, %v375
      %v384 = vmul.f32 %v328, %v376
      %v385 = vmul.f32 %v329, %v377
      %v386 = vmul.f32 %v330, %v378
      %v387 = vmul.f32 %v331, %v379
      %v388 = vmul.f32 %v332, %v380
      %v389 = vmul.f32 %v333, %v381
      %v390 = vmul.f32 %v366, 2.0
      %v391 = vmul.f32 %v367, 2.0
      %v392 = vmul.f32 %v368, 2.0
      %v393 = vmul.f32 %v369, 2.0
      %v394 = vmul.f32 %v370, 2.0
      %v395 = vmul.f32 %v371, 2.0
      %v396 = vmul.f32 %v372, 2.0
      %v397 = vmul.f32 %v373, 2.0
      %v398 = vsub.f32 %v382, %v390
      %v399 = vsub.f32 %v383, %v391
      %v400 = vsub.f32 %v384, %v392
      %v401 = vsub.f32 %v385, %v393
      %v402 = vsub.f32 %v386, %v394
      %v403 = vsub.f32 %v387, %v395
      %v404 = vsub.f32 %v388, %v396
      %v405 = vsub.f32 %v389, %v397
      %v406 = vadd.f32 %v350, %v351
      %v407 = vadd.f32 %v406, %v352
      %v408 = vadd.f32 %v407, %v353
      %v409 = vadd.f32 %v408, %v354
      %v410 = vadd.f32 %v409, %v355
      %v411 = vadd.f32 %v410, %v356
      %v412 = vadd.f32 %v411, %v357
      %413 = vadd.xlane.f32.xlu0 %v412
      %v414 = vpop.xlane.xlu0 %413
      %v415 = vmul.f32 %v414, %v264
      %v416 = vmul.f32 %v294, %v366
      %v417 = vmul.f32 %v295, %v367
      %v418 = vmul.f32 %v296, %v368
      %v419 = vmul.f32 %v297, %v369
      %v420 = vmul.f32 %v298, %v370
      %v421 = vmul.f32 %v299, %v371
      %v422 = vmul.f32 %v300, %v372
      %v423 = vmul.f32 %v301, %v373
      %v424 = vadd.f32 %v416, %v417
      %v425 = vadd.f32 %v424, %v418
      %v426 = vadd.f32 %v425, %v419
      %v427 = vadd.f32 %v426, %v420
      %v428 = vadd.f32 %v427, %v421
      %v429 = vadd.f32 %v428, %v422
      %v430 = vadd.f32 %v429, %v423
      %431 = vadd.xlane.f32.xlu0 %v430
      %v432 = vpop.xlane.xlu0 %431
      %v433 = vmul.f32 %v432, %v264
      %v434 = vadd.f32 %v366, %v367
      %v435 = vadd.f32 %v434, %v368
      %v436 = vadd.f32 %v435, %v369
      %v437 = vadd.f32 %v436, %v370
      %v438 = vadd.f32 %v437, %v371
      %v439 = vadd.f32 %v438, %v372
      %v440 = vadd.f32 %v439, %v373
      %441 = vadd.xlane.f32.xlu0 %v440
      %v442 = vpop.xlane.xlu0 %441
      %v443 = vmul.f32 %v442, %v264
      %v444 = vmul.f32 %v366, %v366
      %v445 = vmul.f32 %v367, %v367
      %v446 = vmul.f32 %v368, %v368
      %v447 = vmul.f32 %v369, %v369
      %v448 = vmul.f32 %v370, %v370
      %v449 = vmul.f32 %v371, %v371
      %v450 = vmul.f32 %v372, %v372
      %v451 = vmul.f32 %v373, %v373
      %v452 = vadd.f32 %v444, %v445
      %v453 = vadd.f32 %v452, %v446
      %v454 = vadd.f32 %v453, %v447
      %v455 = vadd.f32 %v454, %v448
      %v456 = vadd.f32 %v455, %v449
      %v457 = vadd.f32 %v456, %v450
      %v458 = vadd.f32 %v457, %v451
      %459 = vadd.xlane.f32.xlu0 %v458
      %v460 = vpop.xlane.xlu0 %459
      %v461 = vmul.f32 %v460, %v264
      %v462 = vmul.f32 %v318, %v398
      %v463 = vmul.f32 %v319, %v399
      %v464 = vmul.f32 %v320, %v400
      %v465 = vmul.f32 %v321, %v401
      %v466 = vmul.f32 %v322, %v402
      %v467 = vmul.f32 %v323, %v403
      %v468 = vmul.f32 %v324, %v404
      %v469 = vmul.f32 %v325, %v405
      %v470 = vadd.f32 %v462, %v463
      %v471 = vadd.f32 %v470, %v464
      %v472 = vadd.f32 %v471, %v465
      %v473 = vadd.f32 %v472, %v466
      %v474 = vadd.f32 %v473, %v467
      %v475 = vadd.f32 %v474, %v468
      %v476 = vadd.f32 %v475, %v469
      %477 = vadd.xlane.f32.xlu0 %v476
      %v478 = vpop.xlane.xlu0 %477
      %v479 = vmul.f32 %v478, %v264
      %v480 = vmul.f32 %v433, 2.0
      %v481 = vmul.f32 %v480, 0.5
      %v482 = vsub.f32 %v481, %v415
      %v483 = vadd.f32 %v479, %v461
      %v484 = vmul.f32 %v443, %v443
      %v485 = vsub.f32 %v483, %v484
      %v486 = vmul.f32 %v485, 2.0
      %v487 = vmul.f32 %v486, 0.5
      %v488 = vmul.f32 %v480, %v480
      %v489 = vmul.f32 %v488, 0.5
      %v490 = vsub.f32 %v487, %v489
      %v491 = vadd.f32 %v490, 0.0031622776
      %v492 = vrcp.pop %v491
      %v493 = vmul.f32 %v482, %v492
      %v494 = vsub.f32 1.0, %v493
      %v495 = vsub.f32 2.0, %v494
      %vm496 = vcmp.ge.f32.partialorder %v494, 0.0
      %v497 = vsel %vm496, 0.0031622776, -0.0031622776
      %v498 = vadd.f32 %v494, %v497
      %vm499 = vcmp.ge.f32.partialorder %v495, 0.0
      %v500 = vsel %vm499, 0.0031622776, -0.0031622776
      %v501 = vadd.f32 %v495, %v500
      %v502 = vrcp.pop %v498
      %v503 = vmul.f32 1.0, %v502
      %v504 = vrcp.pop %v501
      %v505 = vmul.f32 1.0, %v504
      %v506 = vand.u32 2147483647, %v494
      %vm507 = vcmp.le.f32.partialorder %v506, 0.0031622776
      %v508 = vsel %vm507, 1.0, 0.0
      %v509 = vand.u32 2147483647, %v495
      %vm510 = vcmp.le.f32.partialorder %v509, 0.0031622776
      %v511 = vsel %vm510, 1.0, 0.0
      %v512 = vsel %vm302, %v498, %v501
      %v513 = vsel %vm303, %v498, %v501
      %v514 = vsel %vm304, %v498, %v501
      %v515 = vsel %vm305, %v498, %v501
      %v516 = vsel %vm306, %v498, %v501
      %v517 = vsel %vm307, %v498, %v501
      %v518 = vsel %vm308, %v498, %v501
      %v519 = vsel %vm309, %v498, %v501
      %v520 = vsub.f32 0.0, %v505
      %v521 = vsel %vm302, %v503, %v520
      %v522 = vsel %vm303, %v503, %v520
      %v523 = vsel %vm304, %v503, %v520
      %v524 = vsel %vm305, %v503, %v520
      %v525 = vsel %vm306, %v503, %v520
      %v526 = vsel %vm307, %v503, %v520
      %v527 = vsel %vm308, %v503, %v520
      %v528 = vsel %vm309, %v503, %v520
      %v529 = vsel %vm302, %v508, %v511
      %v530 = vsel %vm303, %v508, %v511
      %v531 = vsel %vm304, %v508, %v511
      %v532 = vsel %vm305, %v508, %v511
      %v533 = vsel %vm306, %v508, %v511
      %v534 = vsel %vm307, %v508, %v511
      %v535 = vsel %vm308, %v508, %v511
      %v536 = vsel %vm309, %v508, %v511
      %v537 = vmul.f32 %v512, %v335
      %v538 = vmul.f32 %v513, %v337
      %v539 = vmul.f32 %v514, %v339
      %v540 = vmul.f32 %v515, %v341
      %v541 = vmul.f32 %v516, %v343
      %v542 = vmul.f32 %v517, %v345
      %v543 = vmul.f32 %v518, %v347
      %v544 = vmul.f32 %v519, %v349
      %v545 = vmul.f32 %v537, 1.442695
      %v546 = vpow.pop %v545
      %v547 = vmul.f32 %v538, 1.442695
      %v548 = vpow.pop %v547
      %v549 = vmul.f32 %v539, 1.442695
      %v550 = vpow.pop %v549
      %v551 = vmul.f32 %v540, 1.442695
      %v552 = vpow.pop %v551
      %v553 = vmul.f32 %v541, 1.442695
      %v554 = vpow.pop %v553
      %v555 = vmul.f32 %v542, 1.442695
      %v556 = vpow.pop %v555
      %v557 = vmul.f32 %v543, 1.442695
      %v558 = vpow.pop %v557
      %v559 = vmul.f32 %v544, 1.442695
      %v560 = vpow.pop %v559
      %v561 = vsub.f32 %v546, 1.0
      %v562 = vsub.f32 %v548, 1.0
      %v563 = vsub.f32 %v550, 1.0
      %v564 = vsub.f32 %v552, 1.0
      %v565 = vsub.f32 %v554, 1.0
      %v566 = vsub.f32 %v556, 1.0
      %v567 = vsub.f32 %v558, 1.0
      %v568 = vsub.f32 %v560, 1.0
      %v569 = vmul.f32 %v521, %v561
      %v570 = vmul.f32 %v522, %v562
      %v571 = vmul.f32 %v523, %v563
      %v572 = vmul.f32 %v524, %v564
      %v573 = vmul.f32 %v525, %v565
      %v574 = vmul.f32 %v526, %v566
      %v575 = vmul.f32 %v527, %v567
      %v576 = vmul.f32 %v528, %v568
      %vm577 = vcmp.gt.f32.partialorder %v529, 0.5
      %vm578 = vcmp.gt.f32.partialorder %v530, 0.5
      %vm579 = vcmp.gt.f32.partialorder %v531, 0.5
      %vm580 = vcmp.gt.f32.partialorder %v532, 0.5
      %vm581 = vcmp.gt.f32.partialorder %v533, 0.5
      %vm582 = vcmp.gt.f32.partialorder %v534, 0.5
      %vm583 = vcmp.gt.f32.partialorder %v535, 0.5
      %vm584 = vcmp.gt.f32.partialorder %v536, 0.5
      %v585 = vsel %vm577, %v350, %v569
      %v586 = vsel %vm578, %v351, %v570
      %v587 = vsel %vm579, %v352, %v571
      %v588 = vsel %vm580, %v353, %v572
      %v589 = vsel %vm581, %v354, %v573
      %v590 = vsel %vm582, %v355, %v574
      %v591 = vsel %vm583, %v356, %v575
      %v592 = vsel %vm584, %v357, %v576
      %v593 = vld [vmem:[%s232] sm:$0xff]
      %v594 = vld [vmem:[%s232 + $0x8] sm:$0xff]
      %v595 = vld [vmem:[%s232 + $0x10] sm:$0xff]
      %v596 = vld [vmem:[%s232 + $0x18] sm:$0xff]
      %v597 = vld [vmem:[%s232 + $0x20] sm:$0xff]
      %v598 = vld [vmem:[%s232 + $0x28] sm:$0xff]
      %v599 = vld [vmem:[%s232 + $0x30] sm:$0xff]
      %v600 = vld [vmem:[%s232 + $0x38] sm:$0xff]
      %v601 = vld [vmem:[%s237] sm:$0xff]
      %v602 = vld [vmem:[%s237 + $0x8] sm:$0xff]
      %v603 = vld [vmem:[%s237 + $0x10] sm:$0xff]
      %v604 = vld [vmem:[%s237 + $0x18] sm:$0xff]
      %v605 = vld [vmem:[%s237 + $0x20] sm:$0xff]
      %v606 = vld [vmem:[%s237 + $0x28] sm:$0xff]
      %v607 = vld [vmem:[%s237 + $0x30] sm:$0xff]
      %v608 = vld [vmem:[%s237 + $0x38] sm:$0xff]
      %v609 = vmul.f32 %v585, %v593
      %v610 = vmul.f32 %v586, %v594
      %v611 = vmul.f32 %v587, %v595
      %v612 = vmul.f32 %v588, %v596
      %v613 = vmul.f32 %v589, %v597
      %v614 = vmul.f32 %v590, %v598
      %v615 = vmul.f32 %v591, %v599
      %v616 = vmul.f32 %v592, %v600
      %v617 = vadd.f32 %v609, %v601
      %v618 = vadd.f32 %v610, %v602
      %v619 = vadd.f32 %v611, %v603
      %v620 = vadd.f32 %v612, %v604
      %v621 = vadd.f32 %v613, %v605
      %v622 = vadd.f32 %v614, %v606
      %v623 = vadd.f32 %v615, %v607
      %v624 = vadd.f32 %v616, %v608
      %625 = vst [vmem:[%s246] sm:$0xff] %v617
      %626 = vst [vmem:[%s246 + $0x8] sm:$0xff] %v618
      %627 = vst [vmem:[%s246 + $0x10] sm:$0xff] %v619
      %628 = vst [vmem:[%s246 + $0x18] sm:$0xff] %v620
      %629 = vst [vmem:[%s246 + $0x20] sm:$0xff] %v621
      %630 = vst [vmem:[%s246 + $0x28] sm:$0xff] %v622
      %631 = vst [vmem:[%s246 + $0x30] sm:$0xff] %v623
      %632 = vst [vmem:[%s246 + $0x38] sm:$0xff] %v624
      %p633 = scmp.lt.s32.totalorder %s19, 1
      %s634 = scalar_select %p633, %s19, 1
      %p635 = scmp.lt.s32.totalorder %s18, 0
      %s636 = scalar_select %p635, %s18, 0
      %s637 = smul.addr %s636, 8
      %s638 = smul.addr %s634, 8
      %s639 = sadd.s32 %s637, %s638
      %s640 = smul.addr %s639, 8
      %s641 = scalar_lea.vmem %s3, %s640
      // Predicated region
      $region33: #{group_normal_norm.1} parent=31 // pred_check
        %p642 = pneg %p126
      $region34: #{group_normal_norm.1} parent=31 // pred_check_branch
        %644 = sbr.rel (%p642) target = $region36
      $region35: #{group_normal_norm.1} parent=31 // pred_region
        _
      $region36: #{group_normal_norm.1} parent=31 // pred_fallthru
        _
    $region32: #{group_normal_norm.1} parent=5 // pred_fallthru
      _
    %p645 = scmp.le.s32.totalorder 2, %s9
    // Predicated region
    $region37: #{group_normal_norm.1} parent=5 // pred_check
      %p646 = pneg %p645
    $region38: #{group_normal_norm.1} parent=5 // pred_check_branch
      %648 = sbr.rel (%p646) target = $region40
    $region39: #{group_normal_norm.1} parent=5 // pred_region
      %s649 = ssub.s32 %s9, 2
      // Predicated region
      $region41: #{group_normal_norm.1} parent=39 // pred_check
        %p650 = pneg %p132
      $region42: #{group_normal_norm.1} parent=39 // pred_check_branch
        %652 = sbr.rel (%p650) target = $region44
      $region43: #{group_normal_norm.1} parent=39 // pred_region
        %p653 = scmp.lt.s32.totalorder %s21, 1
        %s654 = scalar_select %p653, %s21, 1
        %p655 = scmp.lt.s32.totalorder %s20, 0
        %s656 = scalar_select %p655, %s20, 0
        %s657 = smul.addr %s656, 8
        %s658 = smul.addr %s654, 8
        %s659 = sadd.s32 %s657, %s658
        %s660 = smul.addr %s659, 8
        %s661 = scalar_lea.vmem %s3, %s660
      $region44: #{group_normal_norm.1} parent=39 // pred_fallthru
        _
    $region40: #{group_normal_norm.1} parent=5 // pred_fallthru
      _
  $region6: #{group_normal_norm.1} parent=0 // loop_footer
    %s13 = sadd.s32 1, %s9
  $region7: #{group_normal_norm.1} parent=0 // loop_footer_branch
    %8 = sbr.rel target = $region3
  $region8: #{group_normal_norm.1} parent=0 // loop_exit
    _

</llo_original>
